<compile_context>
chip_gen: v7x
topology: tpu7x:2x2x1
jax: 0.10.0
libtpu: 0.0.40
codegen_flags: <defaults>
</compile_context>

<pallas_src>
import functools

import jax
import jax.numpy as jnp
from jax.experimental import pallas as pl
from jax.experimental.pallas import tpu as pltpu

_MASK_VALUE = -1e30                 # exp(_MASK_VALUE - m) underflows to 0 exactly
_VMEM_LIMIT = 48 * 1024 * 1024      # headroom under v7x's 64 MiB physical VMEM


# ----------------------------------------------------------------------------
# qkv linear kernel: one x row-tile -> q tile (tm, C) and kv tile (tm, 2C).
# Weight / bias blocks use constant index_maps so they stay resident in VMEM
# across row tiles (no per-tile W re-fetch — the dominant HBM stream on v5e).
# ----------------------------------------------------------------------------
def _qkv_kernel(x_ref, wq_ref, bq_ref, wkv_ref, bkv_ref, q_ref, kv_ref):
    x = x_ref[...].astype(jnp.bfloat16)            # bf16 MXU operands, f32 accum
    q = jnp.dot(x, wq_ref[...].astype(jnp.bfloat16),
                preferred_element_type=jnp.float32)
    q_ref[...] = (q + bq_ref[...]).astype(q_ref.dtype)
    kv = jnp.dot(x, wkv_ref[...].astype(jnp.bfloat16),
                 preferred_element_type=jnp.float32)
    kv_ref[...] = (kv + bkv_ref[...]).astype(kv_ref.dtype)


def pallas_qkv(x2d, wq, bq, wkv, bkv, *, tm=512):
    """x2d: (M, K) -> (q: (M, C), kv: (M, 2C)) with q = x@wq+bq, kv = x@wkv+bkv."""
    M, K = x2d.shape
    C = wq.shape[1]
    tm_eff = M if M <= tm else tm
    grid = (pl.cdiv(M, tm_eff),)                   # ragged last block is clipped
    cost = pl.CostEstimate(
        flops=2 * M * K * 3 * C,
        transcendentals=0,
        bytes_accessed=4 * (M * K + K * 3 * C + 3 * C + M * 3 * C),
    )
    return pl.pallas_call(
        _qkv_kernel,
        out_shape=(jax.ShapeDtypeStruct((M, C), x2d.dtype),
                   jax.ShapeDtypeStruct((M, 2 * C), x2d.dtype)),
        grid=grid,
        in_specs=[
            pl.BlockSpec((tm_eff, K), lambda i: (i, 0)),
            pl.BlockSpec((K, C), lambda i: (0, 0)),        # resident
            pl.BlockSpec((1, C), lambda i: (0, 0)),        # resident
            pl.BlockSpec((K, 2 * C), lambda i: (0, 0)),    # resident
            pl.BlockSpec((1, 2 * C), lambda i: (0, 0)),    # resident
        ],
        out_specs=(pl.BlockSpec((tm_eff, C), lambda i: (i, 0)),
                   pl.BlockSpec((tm_eff, 2 * C), lambda i: (i, 0))),
        compiler_params=pltpu.CompilerParams(
            dimension_semantics=("parallel",),
            vmem_limit_bytes=_VMEM_LIMIT),
        cost_estimate=cost,
    )(x2d, wq, bq.reshape(1, C), wkv, bkv.reshape(1, 2 * C))


# ----------------------------------------------------------------------------
# Fused attention + output projection kernel.
# One grid step = (batch element, query tile); heads are looped in-kernel with
# 2-D bf16 matmuls; per-source score blocks share one softmax; the output
# projection is accumulated per head (K-split over C).
# ----------------------------------------------------------------------------
def _attn_proj_kernel(*refs, num_heads, head_dim, n_kv):
    q_ref = refs[0]                       # (tq, C)   — own stream queries
    kv_refs = refs[1:1 + n_kv]            # (N, 2C)   — [own stream, others...]
    wp_ref = refs[1 + n_kv]               # (C, C)    — projection weight
    bp_ref = refs[2 + n_kv]               # (1, C)    — projection bias
    o_ref = refs[3 + n_kv]                # (tq, C)   — lane-dense output

    C = num_heads * head_dim
    tq = q_ref.shape[0]
    n_keys = kv_refs[0].shape[0]

    # CLS-key mask for summary sources: score column 0 -> -1e30 (weight 0).
    if n_kv > 1:
        col0 = jax.lax.broadcasted_iota(jnp.int32, (tq, n_keys), 1) == 0

    wp = wp_ref[...].astype(jnp.bfloat16)             # resident proj weight
    acc = jnp.zeros((tq, C), jnp.float32)             # projected output accum

    for h in range(num_heads):
        qo = h * head_dim
        # q columns are pre-scaled at init (softmax scale folded into wq/bq).
        q_h = q_ref[:, qo:qo + head_dim].astype(jnp.bfloat16)          # (tq, Dh)

        # One score block per KV source (bf16 MXU, f32 accumulate).
        s_blocks = []
        for j in range(n_kv):
            k_h = kv_refs[j][:, qo:qo + head_dim].astype(jnp.bfloat16)  # (N, Dh)
            s = jnp.einsum("qd,kd->qk", q_h, k_h,
                           preferred_element_type=jnp.float32)          # (tq, N)
            if j > 0:
                s = jnp.where(col0, _MASK_VALUE, s)    # drop other-stream CLS key
            s_blocks.append(s)

        # Shared softmax across all KV sources (single global max / denom).
        m = s_blocks[0].max(axis=-1, keepdims=True)
        for s in s_blocks[1:]:
            m = jnp.maximum(m, s.max(axis=-1, keepdims=True))
        denom = jnp.zeros((tq, 1), jnp.float32)
        o_h = jnp.zeros((tq, head_dim), jnp.float32)
        for j in range(n_kv):
            p = jnp.exp(s_blocks[j] - m)
            denom = denom + p.sum(axis=-1, keepdims=True)
            v_h = kv_refs[j][:, C + qo:C + qo + head_dim].astype(jnp.bfloat16)
            o_h = o_h + jnp.einsum("qk,kd->qd", p.astype(jnp.bfloat16), v_h,
                                   preferred_element_type=jnp.float32)
        o_h = o_h * pl.reciprocal(denom, approx=True)

        # Fused output projection, accumulated per head (K-split over C).
        acc = acc + jnp.dot(o_h.astype(jnp.bfloat16), wp[qo:qo + head_dim, :],
                            preferred_element_type=jnp.float32)

    o_ref[...] = (acc + bp_ref[...]).astype(o_ref.dtype)


def fused_attention(params, q_self, kv_self, kv_others, *, tq=256):
    """q_self: (B,N,C); kv_self / kv_others[i]: (B,N,2C).  Returns (B,N,C)."""
    B, N, C = q_self.shape
    H = params["num_heads"]
    Dh = C // H
    n_kv = 1 + len(kv_others)

    if N > tq and N % tq == 0:
        tq_eff, nq = tq, N // tq
    else:
        tq_eff, nq = N, 1          # small / ragged N: one query tile per batch

    kernel = functools.partial(_attn_proj_kernel,
                               num_heads=H, head_dim=Dh, n_kv=n_kv)
    q_spec = pl.BlockSpec((None, tq_eff, C), lambda b, qi: (b, qi, 0))
    kv_spec = pl.BlockSpec((None, N, 2 * C), lambda b, qi: (b, 0, 0))
    in_specs = [q_spec] + [kv_spec] * n_kv + [
        pl.BlockSpec((C, C), lambda b, qi: (0, 0)),      # resident proj weight
        pl.BlockSpec((1, C), lambda b, qi: (0, 0)),      # resident proj bias
    ]
    L = N * n_kv
    cost = pl.CostEstimate(
        flops=B * (4 * H * N * L * Dh + 2 * N * C * C),
        transcendentals=B * H * N * L,
        bytes_accessed=4 * B * (2 * N * C + n_kv * N * 2 * C) + 4 * (C * C + C),
    )
    return pl.pallas_call(
        kernel,
        out_shape=jax.ShapeDtypeStruct((B, N, C), q_self.dtype),
        grid=(B, nq),
        in_specs=in_specs,
        out_specs=pl.BlockSpec((None, tq_eff, C), lambda b, qi: (b, qi, 0)),
        compiler_params=pltpu.CompilerParams(
            dimension_semantics=("parallel", "parallel"),
            vmem_limit_bytes=_VMEM_LIMIT),
        cost_estimate=cost,
    )(q_self, kv_self, *kv_others, params["proj_w"], params["proj_b"].reshape(1, C))


# ----------------------------------------------------------------------------
# Inner attention module (ViT-style), built on the Pallas kernels
# ----------------------------------------------------------------------------
def init_attention_params(key, dim, num_heads):
    k1, k2, k3, k4 = jax.random.split(key, 4)
    head_dim = dim // num_heads
    scale = float(head_dim) ** -0.5
    qkv_w = 0.02 * jax.random.normal(k1, (dim, 3 * dim), jnp.float32)
    qkv_b = 0.01 * jax.random.normal(k2, (3 * dim,), jnp.float32)
    # Fold the softmax scale into the q columns (mathematically identical to
    # scaling the scores; done once at init so the kernel never multiplies q).
    return {
        "num_heads": num_heads,
        "scale": scale,
        "wq": qkv_w[:, :dim] * scale,
        "bq": qkv_b[:dim] * scale,
        "wkv": qkv_w[:, dim:],
        "bkv": qkv_b[dim:],
        "proj_w": 0.02 * jax.random.normal(k3, (dim, dim), jnp.float32),
        "proj_b": 0.01 * jax.random.normal(k4, (dim,), jnp.float32),
    }


def cal_qkv(params, x):
    """x: (B,N,C) -> q (B,N,C) [scale pre-folded] and lane-dense kv (B,N,2C)."""
    B, N, C = x.shape
    q2d, kv2d = pallas_qkv(x.reshape(B * N, C), params["wq"], params["bq"],
                           params["wkv"], params["bkv"])
    return q2d.reshape(B, N, C), kv2d.reshape(B, N, 2 * C)


# ----------------------------------------------------------------------------
# FusionAttention.forward
# ----------------------------------------------------------------------------
def fusion_attention_forward(params_list, x_l, externel_bool):
    n = len(x_l)
    qkv = [cal_qkv(params_list[i], x_l[i]) for i in range(n)]
    q_l = [q for q, _ in qkv]
    kv_l = [kv for _, kv in qkv]
    if (not externel_bool) or n == 1:
        return [fused_attention(params_list[i], q_l[i], kv_l[i], [])
                for i in range(n)]
    outputs = []
    for i in range(n):
        # Summary K/V sources = every other stream's kv (CLS masked in-kernel).
        others = [kv_l[j] for j in range(n) if j != i]
        outputs.append(fused_attention(params_list[i], q_l[i], kv_l[i], others))
    return outputs


# ----------------------------------------------------------------------------
# Pure-JAX reference (for correctness check only)
# ----------------------------------------------------------------------------
def _ref_cal_qkv(p, x):
    B, N, C = x.shape
    H = p["num_heads"]
    Dh = C // H
    q = x @ p["wq"] + p["bq"]                  # scale already folded into wq/bq
    kv = x @ p["wkv"] + p["bkv"]
    k, v = kv[..., :C], kv[..., C:]
    to_heads = lambda t: t.reshape(B, N, H, Dh).transpose(0, 2, 1, 3)
    return to_heads(q), to_heads(k), to_heads(v)


def _ref_attend(p, q, k, v):
    B, H, N, Dh = q.shape
    C = H * Dh
    s = jnp.einsum("bhnd,bhld->bhnl", q, k)    # no extra scale (folded into q)
    a = jax.nn.softmax(s, axis=-1)
    o = jnp.einsum("bhnl,bhld->bhnd", a, v)
    o = o.transpose(0, 2, 1, 3).reshape(B * N, C)
    return (o @ p["proj_w"] + p["proj_b"]).reshape(B, N, C)


def reference_forward(params_list, x_l, externel_bool):
    n = len(x_l)
    if (not externel_bool) or n == 1:
        outs = []
        for i in range(n):
            q, k, v = _ref_cal_qkv(params_list[i], x_l[i])
            outs.append(_ref_attend(params_list[i], q, k, v))
        return outs
    qkv_l = [_ref_cal_qkv(params_list[i], x_l[i]) for i in range(n)]
    outs = []
    for i in range(n):
        sk = jnp.concatenate([qkv_l[j][1][:, :, 1:, :] for j in range(n) if j != i], 2)
        sv = jnp.concatenate([qkv_l[j][2][:, :, 1:, :] for j in range(n) if j != i], 2)
        k_all = jnp.concatenate([qkv_l[i][1], sk], axis=2)
        v_all = jnp.concatenate([qkv_l[i][2], sv], axis=2)
        outs.append(_ref_attend(params_list[i], qkv_l[i][0], k_all, v_all))
    return outs


# ----------------------------------------------------------------------------
if __name__ == "__main__":
    num_streams, B, N, C, H = 2, 2, 8, 32, 4   # N includes a CLS token at index 0

    key = jax.random.PRNGKey(0)
    pkeys = jax.random.split(key, num_streams + 1)
    params_list = [init_attention_params(pkeys[i], C, H) for i in range(num_streams)]
    xkeys = jax.random.split(pkeys[-1], num_streams)
    x_l = [jax.random.normal(xkeys[i], (B, N, C), jnp.float32)
           for i in range(num_streams)]

    # Fusion path (externel_bool=True)
    outs = jax.block_until_ready(fusion_attention_forward(params_list, x_l, True))
    refs = reference_forward(params_list, x_l, True)
    for o, r in zip(outs, refs):
        assert o.shape == r.shape and o.dtype == r.dtype
        # Tolerance loosened vs the all-f32 version: MXU operands are bf16 now.
        assert jnp.max(jnp.abs(o - r)) < 5e-3, "fusion path mismatch"

    # Plain per-stream self-attention path (externel_bool=False)
    outs_f = jax.block_until_ready(fusion_attention_forward(params_list, x_l, False))
    refs_f = reference_forward(params_list, x_l, False)
    for o, r in zip(outs_f, refs_f):
        assert jnp.max(jnp.abs(o - r)) < 5e-3, "self-attention path mismatch"

    print("KERNEL_OK")
</pallas_src>

<mosaic_0001>
module attributes {stable_mosaic.version = 11 : i64} {
  func.func @_qkv_kernel(%arg0: i32, %arg1: memref<16x32xf32, #tpu.memory_space<vmem>>, %arg2: memref<32x32xf32, #tpu.memory_space<vmem>>, %arg3: memref<1x32xf32, #tpu.memory_space<vmem>>, %arg4: memref<32x64xf32, #tpu.memory_space<vmem>>, %arg5: memref<1x64xf32, #tpu.memory_space<vmem>>, %arg6: memref<16x32xf32, #tpu.memory_space<vmem>>, %arg7: memref<16x64xf32, #tpu.memory_space<vmem>>) attributes {dimension_semantics = [#tpu.dimension_semantics<parallel>], iteration_bounds = array<i64: 1>, scalar_prefetch = 0 : i64, scratch_operands = 0 : i64, tpu.core_type = #tpu.core_type<tc>, window_params = [{transform_indices = @transform_0, window_bounds = array<i64: 16, 32>}, {pipeline_mode = #tpu.pipeline_mode<synchronous>, transform_indices = @transform_1, window_bounds = array<i64: 32, 32>}, {pipeline_mode = #tpu.pipeline_mode<synchronous>, transform_indices = @transform_2, window_bounds = array<i64: 1, 32>}, {pipeline_mode = #tpu.pipeline_mode<synchronous>, transform_indices = @transform_3, window_bounds = array<i64: 32, 64>}, {pipeline_mode = #tpu.pipeline_mode<synchronous>, transform_indices = @transform_4, window_bounds = array<i64: 1, 64>}, {transform_indices = @transform_5, window_bounds = array<i64: 16, 32>}, {transform_indices = @transform_6, window_bounds = array<i64: 16, 64>}]} {
    %c0 = arith.constant 0 : index
    %c0_0 = arith.constant 0 : index
    %0 = vector.load %arg1[%c0, %c0_0] : memref<16x32xf32, #tpu.memory_space<vmem>>, vector<16x32xf32>
    %1 = arith.truncf %0 : vector<16x32xf32> to vector<16x32xbf16>
    %c0_1 = arith.constant 0 : index
    %c0_2 = arith.constant 0 : index
    %2 = vector.load %arg2[%c0_1, %c0_2] : memref<32x32xf32, #tpu.memory_space<vmem>>, vector<32x32xf32>
    %3 = arith.truncf %2 : vector<32x32xf32> to vector<32x32xbf16>
    %cst = arith.constant dense<0.000000e+00> : vector<16x32xf32>
    %4 = tpu.matmul %1, %3, %cst {dimension_numbers = #tpu.dot_dimension_numbers<[1], [0], [0], [1], [0, 0, 1, 1], [], []>} : vector<16x32xbf16>, vector<32x32xbf16>, vector<16x32xf32> -> vector<16x32xf32>
    %c0_3 = arith.constant 0 : index
    %c0_4 = arith.constant 0 : index
    %5 = vector.load %arg3[%c0_3, %c0_4] : memref<1x32xf32, #tpu.memory_space<vmem>>, vector<1x32xf32>
    %6 = vector.broadcast %5 : vector<1x32xf32> to vector<16x32xf32>
    %7 = arith.addf %4, %6 : vector<16x32xf32>
    %c0_5 = arith.constant 0 : index
    %c0_6 = arith.constant 0 : index
    %8 = vector.load %arg6[%c0_5, %c0_6] : memref<16x32xf32, #tpu.memory_space<vmem>>, vector<16x32xf32>
    tpu.vector_store %arg6[%c0_5, %c0_6], %7 {strides = array<i32>} : memref<16x32xf32, #tpu.memory_space<vmem>>, vector<16x32xf32>,
    %c0_7 = arith.constant 0 : index
    %c0_8 = arith.constant 0 : index
    %9 = vector.load %arg4[%c0_7, %c0_8] : memref<32x64xf32, #tpu.memory_space<vmem>>, vector<32x64xf32>
    %10 = arith.truncf %9 : vector<32x64xf32> to vector<32x64xbf16>
    %cst_9 = arith.constant dense<0.000000e+00> : vector<16x64xf32>
    %11 = tpu.matmul %1, %10, %cst_9 {dimension_numbers = #tpu.dot_dimension_numbers<[1], [0], [0], [1], [0, 0, 1, 1], [], []>} : vector<16x32xbf16>, vector<32x64xbf16>, vector<16x64xf32> -> vector<16x64xf32>
    %c0_10 = arith.constant 0 : index
    %c0_11 = arith.constant 0 : index
    %12 = vector.load %arg5[%c0_10, %c0_11] : memref<1x64xf32, #tpu.memory_space<vmem>>, vector<1x64xf32>
    %13 = vector.broadcast %12 : vector<1x64xf32> to vector<16x64xf32>
    %14 = arith.addf %11, %13 : vector<16x64xf32>
    %c0_12 = arith.constant 0 : index
    %c0_13 = arith.constant 0 : index
    %15 = vector.load %arg7[%c0_12, %c0_13] : memref<16x64xf32, #tpu.memory_space<vmem>>, vector<16x64xf32>
    tpu.vector_store %arg7[%c0_12, %c0_13], %14 {strides = array<i32>} : memref<16x64xf32, #tpu.memory_space<vmem>>, vector<16x64xf32>,
    return
  }
  func.func @transform_0(%arg0: i32) -> (i32, i32) {
    %c0_i32 = arith.constant 0 : i32
    %c0_i32_0 = arith.constant 0 : i32
    return %arg0, %c0_i32 : i32, i32
  }
  func.func @transform_1(%arg0: i32) -> (i32, i32) {
    %c0_i32 = arith.constant 0 : i32
    %c0_i32_0 = arith.constant 0 : i32
    %c0_i32_1 = arith.constant 0 : i32
    return %c0_i32, %c0_i32_0 : i32, i32
  }
  func.func @transform_2(%arg0: i32) -> (i32, i32) {
    %c0_i32 = arith.constant 0 : i32
    %c0_i32_0 = arith.constant 0 : i32
    %c0_i32_1 = arith.constant 0 : i32
    return %c0_i32, %c0_i32_0 : i32, i32
  }
  func.func @transform_3(%arg0: i32) -> (i32, i32) {
    %c0_i32 = arith.constant 0 : i32
    %c0_i32_0 = arith.constant 0 : i32
    %c0_i32_1 = arith.constant 0 : i32
    return %c0_i32, %c0_i32_0 : i32, i32
  }
  func.func @transform_4(%arg0: i32) -> (i32, i32) {
    %c0_i32 = arith.constant 0 : i32
    %c0_i32_0 = arith.constant 0 : i32
    %c0_i32_1 = arith.constant 0 : i32
    return %c0_i32, %c0_i32_0 : i32, i32
  }
  func.func @transform_5(%arg0: i32) -> (i32, i32) {
    %c0_i32 = arith.constant 0 : i32
    %c0_i32_0 = arith.constant 0 : i32
    return %arg0, %c0_i32 : i32, i32
  }
  func.func @transform_6(%arg0: i32) -> (i32, i32) {
    %c0_i32 = arith.constant 0 : i32
    %c0_i32_0 = arith.constant 0 : i32
    return %arg0, %c0_i32 : i32, i32
  }
}

</mosaic_0001>

<llo_original>
// kernel: tpu_custom_call.1
$region0: #{tpu_custom_call.1}
  #allocation0 [shape = 'u32[]', space=smem, size = 0x4, offset = 0x4, fixed_abs, tag = 'smem constant byte address 0x4 - core index']
  #allocation1 [shape = 'u32[144,128]{1,0:T(1,128)}', space=vmem, size = 0x12000, scoped, tag = 'internal scratch']
  %s0 = inlined_call_operand.hbm [shape: f32[16,32], index: 0, kind: input, shape index: {}]
  %s1 = inlined_call_operand.hbm [shape: f32[32,32], index: 1, kind: input, shape index: {}]
  %s2 = inlined_call_operand.vmem [shape: f32[1,32], index: 2, kind: input, shape index: {}]
  %s3 = inlined_call_operand.hbm [shape: f32[32,64], index: 3, kind: input, shape index: {}]
  %s4 = inlined_call_operand.vmem [shape: f32[1,64], index: 4, kind: input, shape index: {}]
  %s5 = inlined_call_operand.hbm [shape: f32[16,32], index: 5, kind: output, shape index: {0}]
  %s6 = inlined_call_operand.hbm [shape: f32[16,64], index: 6, kind: output, shape index: {1}]
  %7 = xla_tuple %s5, %s6
  %s8 = sld [smem:[#allocation0]]
  $region50: #{tpu_custom_call.1} parent=0
    _
  %s10 = ssub.s32 1, %s8
  %s11 = scalar_select 0, %s10, %s8
  $region1: #{tpu_custom_call.1} parent=0
    #allocation2 [shape = 'u8[8192]{0}', space=vmem, size = 0x2000, scoped, tag = 'input window, operand 0, single buffered']
    #allocation3 [shape = 's32[1]{0}', space=sflag, size = 0x4, scoped, tag = 'scoped memory for tpu_custom_call.1']
    #allocation4 [shape = 's32[1]{0}', space=sflag, size = 0x4, scoped, tag = 'scoped memory for tpu_custom_call.1']
    #allocation5 [shape = 'u8[16384]{0}', space=vmem, size = 0x4000, scoped, tag = 'input window, operand 1, single buffered']
    #allocation6 [shape = 's32[1]{0}', space=sflag, size = 0x4, scoped, tag = 'scoped memory for tpu_custom_call.1']
    #allocation7 [shape = 'u8[16384]{0}', space=vmem, size = 0x4000, scoped, tag = 'input window, operand 3, single buffered']
    #allocation8 [shape = 'u8[8192]{0}', space=vmem, size = 0x2000, scoped, tag = 'output window, operand 0, single buffered']
    #allocation9 [shape = 'u8[8192]{0}', space=vmem, size = 0x2000, scoped, tag = 'output window, operand 1, single buffered']
    #allocation10 [shape = 's32[1]{0}', space=sflag, size = 0x4, scoped, tag = 'scoped memory for tpu_custom_call.1']
    %12 = vsyncpa [#allocation3], 0
    %13 = vsyncpa [#allocation6], 0
    %14 = vsyncpa [#allocation4], 0
    %15 = vsyncpa [#allocation10], 0
    // Predicated region
    $region2: #{tpu_custom_call.1} parent=1 // pred_check
      _
    $region3: #{tpu_custom_call.1} parent=1 // pred_check_branch
      %17 = sbr.rel (0) target = $region5
    $region4: #{tpu_custom_call.1} parent=1 // pred_region
      %s19 = ssub.s32 256, 256
      %20 = vsyncadd [#allocation3], %s19
      %s21 = sshll.u32 [#allocation2], 4
      %s22 = int_to_ptr.vmem [resolvable:$true] %s21
      %27 = dma.hbm_to_vmem [thread:$0]  %s0, 256, %s22, [#allocation3], 128, 128, 8
    $region5: #{tpu_custom_call.1} parent=1 // pred_fallthru
      _
    // Predicated region
    $region6: #{tpu_custom_call.1} parent=1 // pred_check
      _
    $region7: #{tpu_custom_call.1} parent=1 // pred_check_branch
      %29 = sbr.rel (0) target = $region9
    $region8: #{tpu_custom_call.1} parent=1 // pred_region
      %s31 = ssub.s32 512, 512
      %32 = vsyncadd [#allocation6], %s31
      %s33 = sshll.u32 [#allocation5], 4
      %s34 = int_to_ptr.vmem [resolvable:$true] %s33
      %39 = dma.hbm_to_vmem [thread:$0]  %s1, 512, %s34, [#allocation6], 128, 128, 8
    $region9: #{tpu_custom_call.1} parent=1 // pred_fallthru
      _
    // Predicated region
    $region10: #{tpu_custom_call.1} parent=1 // pred_check
      _
    $region11: #{tpu_custom_call.1} parent=1 // pred_check_branch
      %41 = sbr.rel (0) target = $region13
    $region12: #{tpu_custom_call.1} parent=1 // pred_region
      _
    $region13: #{tpu_custom_call.1} parent=1 // pred_fallthru
      _
    // Predicated region
    $region14: #{tpu_custom_call.1} parent=1 // pred_check
      _
    $region15: #{tpu_custom_call.1} parent=1 // pred_check_branch
      %43 = sbr.rel (0) target = $region17
    $region16: #{tpu_custom_call.1} parent=1 // pred_region
      %s45 = ssub.s32 512, 512
      %46 = vsyncadd [#allocation6], %s45
      %s47 = sshll.u32 [#allocation7], 4
      %s48 = int_to_ptr.vmem [resolvable:$true] %s47
      %53 = dma.hbm_to_vmem [thread:$0]  %s3, 512, %s48, [#allocation6], 128, 128, 8
    $region17: #{tpu_custom_call.1} parent=1 // pred_fallthru
      _
    // Predicated region
    $region18: #{tpu_custom_call.1} parent=1 // pred_check
      _
    $region19: #{tpu_custom_call.1} parent=1 // pred_check_branch
      %55 = sbr.rel (0) target = $region21
    $region20: #{tpu_custom_call.1} parent=1 // pred_region
      _
    $region21: #{tpu_custom_call.1} parent=1 // pred_fallthru
      _
    // Predicated region
    $region22: #{tpu_custom_call.1} parent=1 // pred_check
      _
    $region23: #{tpu_custom_call.1} parent=1 // pred_check_branch
      %57 = sbr.rel (0) target = $region25
    $region24: #{tpu_custom_call.1} parent=1 // pred_region
      %58 = dma.done [#allocation3], 256
    $region25: #{tpu_custom_call.1} parent=1 // pred_fallthru
      _
    // Predicated region
    $region26: #{tpu_custom_call.1} parent=1 // pred_check
      _
    $region27: #{tpu_custom_call.1} parent=1 // pred_check_branch
      %60 = sbr.rel (0) target = $region29
    $region28: #{tpu_custom_call.1} parent=1 // pred_region
      %61 = dma.done [#allocation6], 512
    $region29: #{tpu_custom_call.1} parent=1 // pred_fallthru
      _
    // Predicated region
    $region30: #{tpu_custom_call.1} parent=1 // pred_check
      _
    $region31: #{tpu_custom_call.1} parent=1 // pred_check_branch
      %63 = sbr.rel (0) target = $region33
    $region32: #{tpu_custom_call.1} parent=1 // pred_region
      %64 = dma.done [#allocation6], 512
    $region33: #{tpu_custom_call.1} parent=1 // pred_fallthru
      _
    %v66 = vld [vmem:[#allocation2] sm:$0xff]
    %v67 = vld [vmem:[#allocation2 + $0x8] sm:$0xff]
    %v68 = vpack.c.bf16 %v67, %v66
    %v69 = vld [vmem:[#allocation5] sm:$0xff]
    %v70 = vld [vmem:[#allocation5 + $0x8] sm:$0xff]
    %v71 = vld [vmem:[#allocation5 + $0x10] sm:$0xff]
    %v72 = vld [vmem:[#allocation5 + $0x18] sm:$0xff]
    %v73 = vpack.c.bf16 %v70, %v69
    %v74 = vpack.c.bf16 %v72, %v71
    %v75 = vld [vmem:[%s2] sm:$0x1]
    %v77 = vlaneseq
    %v78 = vshrl.u32 %v77, 7
    %v79 = vsub.s32 0, %v78
    %v80 = vrot.slane %v75, %v79
    %vm82 = vcmask 261120
    %v84 = vsel %vm82, %v68, 0
    %86 = vmatprep.subr.bf16.mxu0 0
    %87 = vmatpush1.bf16.msra.mxu0 %v73
    %88 = vmatprep.subr.bf16.mxu0 0
    %89 = vmatpush1.bf16.msra.mxu0 %v74
    %90 = vmatprep.subr.bf16.mxu0 0
    %91 = vmatpush1.bf16.msra.mxu0 0
    %92 = vmatprep.subr.bf16.mxu0 0
    %93 = vmatpush1.bf16.msra.mxu0 0
    %94 = vmatprep.subr.bf16.mxu0 0
    %95 = vmatpush1.bf16.msra.mxu0 0
    %96 = vmatprep.subr.bf16.mxu0 0
    %97 = vmatpush1.bf16.msra.mxu0 0
    %98 = vmatprep.subr.bf16.mxu0 0
    %99 = vmatpush1.bf16.msra.mxu0 0
    %100 = vmatprep.subr.bf16.mxu0 0
    %101 = vmatpush1.bf16.msra.mxu0 0
    %102 = vmatprep.subr.bf16.mxu0 0
    %103 = vmatpush1.bf16.msra.mxu0 0
    %104 = vmatprep.subr.bf16.mxu0 0
    %105 = vmatpush1.bf16.msra.mxu0 0
    %106 = vmatprep.subr.bf16.mxu0 0
    %107 = vmatpush1.bf16.msra.mxu0 0
    %108 = vmatprep.subr.bf16.mxu0 0
    %109 = vmatpush1.bf16.msra.mxu0 0
    %110 = vmatprep.subr.bf16.mxu0 0
    %111 = vmatpush1.bf16.msra.mxu0 0
    %112 = vmatprep.subr.bf16.mxu0 0
    %113 = vmatpush1.bf16.msra.mxu0 0
    %114 = vmatprep.subr.bf16.mxu0 0
    %115 = vmatpush1.bf16.msra.mxu0 0
    %116 = vmatprep.subr.bf16.mxu0 0
    %117 = vmatpush1.bf16.msra.mxu0 0
    %118 = vmatprep.mubr.bf16.mxu0 0
    %119 = vmatmul.mubr.bf16.gmra.mrb[0].mxu0 %v84
    %v120 = vpop.f32.mrb[0].mxu0
    %v121 = vadd.f32 %v80, %v120
    %v122 = vpop.f32.mrb[0].mxu0
    %v123 = vpop.f32.mrb[0].mxu0
    %v124 = vadd.f32 %v80, %v123
    %v125 = vpop.f32.mrb[0].mxu0
    %126 = vdwg.mxu0
    %127 = vst.msk [vmem:[#allocation8] sm:$0xff] %vm82, %v121
    %128 = vst.msk [vmem:[#allocation8 + $0x8] sm:$0xff] %vm82, %v124
    %v129 = vld [vmem:[#allocation7] sm:$0xff]
    %v130 = vld [vmem:[#allocation7 + $0x8] sm:$0xff]
    %v131 = vld [vmem:[#allocation7 + $0x10] sm:$0xff]
    %v132 = vld [vmem:[#allocation7 + $0x18] sm:$0xff]
    %v133 = vpack.c.bf16 %v130, %v129
    %v134 = vpack.c.bf16 %v132, %v131
    %v135 = vld [vmem:[%s4] sm:$0x1]
    %v137 = vlaneseq
    %v138 = vshrl.u32 %v137, 7
    %v139 = vsub.s32 0, %v138
    %v140 = vrot.slane %v135, %v139
    %142 = vmatprep.subr.bf16.mxu0 0
    %143 = vmatpush1.bf16.msra.mxu0 %v133
    %144 = vmatprep.subr.bf16.mxu0 0
    %145 = vmatpush1.bf16.msra.mxu0 %v134
    %146 = vmatprep.subr.bf16.mxu0 0
    %147 = vmatpush1.bf16.msra.mxu0 0
    %148 = vmatprep.subr.bf16.mxu0 0
    %149 = vmatpush1.bf16.msra.mxu0 0
    %150 = vmatprep.subr.bf16.mxu0 0
    %151 = vmatpush1.bf16.msra.mxu0 0
    %152 = vmatprep.subr.bf16.mxu0 0
    %153 = vmatpush1.bf16.msra.mxu0 0
    %154 = vmatprep.subr.bf16.mxu0 0
    %155 = vmatpush1.bf16.msra.mxu0 0
    %156 = vmatprep.subr.bf16.mxu0 0
    %157 = vmatpush1.bf16.msra.mxu0 0
    %158 = vmatprep.subr.bf16.mxu0 0
    %159 = vmatpush1.bf16.msra.mxu0 0
    %160 = vmatprep.subr.bf16.mxu0 0
    %161 = vmatpush1.bf16.msra.mxu0 0
    %162 = vmatprep.subr.bf16.mxu0 0
    %163 = vmatpush1.bf16.msra.mxu0 0
    %164 = vmatprep.subr.bf16.mxu0 0
    %165 = vmatpush1.bf16.msra.mxu0 0
    %166 = vmatprep.subr.bf16.mxu0 0
    %167 = vmatpush1.bf16.msra.mxu0 0
    %168 = vmatprep.subr.bf16.mxu0 0
    %169 = vmatpush1.bf16.msra.mxu0 0
    %170 = vmatprep.subr.bf16.mxu0 0
    %171 = vmatpush1.bf16.msra.mxu0 0
    %172 = vmatprep.subr.bf16.mxu0 0
    %173 = vmatpush1.bf16.msra.mxu0 0
    %174 = vmatprep.mubr.bf16.mxu0 0
    %175 = vmatmul.mubr.bf16.gmra.mrb[0].mxu0 %v84
    %v176 = vpop.f32.mrb[0].mxu0
    %v177 = vadd.f32 %v140, %v176
    %v178 = vpop.f32.mrb[0].mxu0
    %v179 = vpop.f32.mrb[0].mxu0
    %v180 = vadd.f32 %v140, %v179
    %v181 = vpop.f32.mrb[0].mxu0
    %182 = vdwg.mxu0
    %vm183 = vcmask 523264
    %184 = vst.msk [vmem:[#allocation9] sm:$0xff] %vm183, %v177
    %185 = vst.msk [vmem:[#allocation9 + $0x8] sm:$0xff] %vm183, %v180
    // Predicated region
    $region34: #{tpu_custom_call.1} parent=1 // pred_check
      _
    $region35: #{tpu_custom_call.1} parent=1 // pred_check_branch
      %187 = sbr.rel (0) target = $region37
    $region36: #{tpu_custom_call.1} parent=1 // pred_region
      %s189 = ssub.s32 256, 256
      %190 = vsyncadd [#allocation4], %s189
      %s191 = sshll.u32 [#allocation8], 4
      %s192 = int_to_ptr.vmem [resolvable:$true] %s191
      %197 = dma.vmem_to_hbm [thread:$0]  %s192, 256, %s5, [#allocation4], 128, 128, 8
    $region37: #{tpu_custom_call.1} parent=1 // pred_fallthru
      _
    // Predicated region
    $region38: #{tpu_custom_call.1} parent=1 // pred_check
      _
    $region39: #{tpu_custom_call.1} parent=1 // pred_check_branch
      %199 = sbr.rel (0) target = $region41
    $region40: #{tpu_custom_call.1} parent=1 // pred_region
      %s201 = ssub.s32 256, 256
      %202 = vsyncadd [#allocation10], %s201
      %s203 = sshll.u32 [#allocation9], 4
      %s204 = int_to_ptr.vmem [resolvable:$true] %s203
      %209 = dma.vmem_to_hbm [thread:$0]  %s204, 256, %s6, [#allocation10], 128, 128, 8
    $region41: #{tpu_custom_call.1} parent=1 // pred_fallthru
      _
    // Predicated region
    $region42: #{tpu_custom_call.1} parent=1 // pred_check
      _
    $region43: #{tpu_custom_call.1} parent=1 // pred_check_branch
      %211 = sbr.rel (0) target = $region45
    $region44: #{tpu_custom_call.1} parent=1 // pred_region
      %212 = dma.done [#allocation4], 256
    $region45: #{tpu_custom_call.1} parent=1 // pred_fallthru
      _
    // Predicated region
    $region46: #{tpu_custom_call.1} parent=1 // pred_check
      _
    $region47: #{tpu_custom_call.1} parent=1 // pred_check_branch
      %214 = sbr.rel (0) target = $region49
    $region48: #{tpu_custom_call.1} parent=1 // pred_region
      %215 = dma.done [#allocation10], 256
    $region49: #{tpu_custom_call.1} parent=1 // pred_fallthru
      _
    %216 = vsyncpa [#allocation3], 1
    %217 = vsyncpa [#allocation6], 1
    %218 = vsyncpa [#allocation4], 1
    %219 = vsyncpa [#allocation10], 1

</llo_original>
